<compile_context>
chip_gen: v7x
topology: tpu7x:2x2x1
jax: 0.10.0
libtpu: 0.0.40
codegen_flags: <defaults>
</compile_context>

<pallas_src>
import functools

import jax
import jax.numpy as jnp
from jax import lax
from jax.experimental import pallas as pl
from jax.experimental.pallas import tpu as pltpu


# ---------------------------------------------------------------------------
# helpers
# ---------------------------------------------------------------------------
def _recip(x):
    """Softmax denominator on the EUP when available."""
    if hasattr(pl, "reciprocal"):
        return pl.reciprocal(x, approx=True)
    return 1.0 / x


def _compiler_params():
    cp_cls = getattr(pltpu, "CompilerParams", None) or getattr(pltpu, "TPUCompilerParams")
    return cp_cls(dimension_semantics=("parallel",),
                  vmem_limit_bytes=32 * 1024 * 1024)


def _bspec_batched(shape, tb):
    """Tile the leading (batch) axis with tile `tb`; keep all other axes whole."""
    nrest = len(shape) - 1
    return pl.BlockSpec((tb,) + tuple(shape[1:]),
                        lambda b, _n=nrest: (b,) + (0,) * _n)


def _bspec_replicated(shape):
    """Whole-array block, same block index for every grid step (weights)."""
    n = len(shape)
    return pl.BlockSpec(tuple(shape), lambda b, _n=n: (0,) * _n)


def _pick_batch_tile(batch, cap=64):
    """Largest multiple-of-8 divisor of `batch` (<= cap, and <= batch//2 when
    possible) so the grid has several parallel steps for megacore + pipelining
    while each tile stays big enough to amortize per-step overhead."""
    if batch <= 8:
        return batch
    limit = min(cap, batch // 2) if batch >= 16 else batch
    for tb in range(limit, 7, -1):
        if batch % tb == 0 and tb % 8 == 0:
            return tb
    return batch


def _pad_lane(x, dp, axes):
    """Zero-pad the given axes of x up to dp (lane-dense layout)."""
    pads = [(0, 0)] * x.ndim
    for ax in axes:
        pads[ax] = (0, dp - x.shape[ax])
    if all(p == (0, 0) for p in pads):
        return x
    return jnp.pad(x, pads)


def _linear(x, w, b):
    # PyTorch nn.Linear semantics: x @ W.T + b   (2-D matmul -> MXU)
    return lax.dot_general(x, w, (((1,), (1,)), ((), ())),
                           preferred_element_type=jnp.float32) + b


def _softmax_last(logits):
    m = jnp.max(logits, axis=-1, keepdims=True)
    e = jnp.exp(logits - m)
    return e * _recip(jnp.sum(e, axis=-1, keepdims=True))


# ---------------------------------------------------------------------------
# Pallas kernels
# ---------------------------------------------------------------------------
def user_agg_kernel(u_ref, ngh_ref, wui_ref, lw_ref, lb_ref, out_ref):
    """UserAggregator: attention over W_ui-transformed item neighbors, tanh Linear."""
    u = u_ref[...]                                     # [TB, D]
    ngh = ngh_ref[...]                                 # [TB, S, D]
    tb, s, d = ngh.shape
    t = jnp.dot(ngh.reshape(tb * s, d), wui_ref[...],
                preferred_element_type=jnp.float32).reshape(tb, s, d)    # MXU
    # NOTE: remaining contractions are O(D) per edge (<1% of MXU FLOPs here),
    # so they stay on the VPU/XLU.
    logits = jnp.sum(u[:, None, :] * t, axis=-1)       # [TB, S]
    att = _softmax_last(logits)
    agg = jnp.sum(att[:, :, None] * t, axis=1)         # [TB, D]
    out_ref[...] = jnp.tanh(_linear(u + agg, lw_ref[...], lb_ref[...]))


def entity_layer_kernel(self_ref, ngh_ref, rel_ref, nghu_ref, base_ref,
                        wui_ref, wr_ref, w1_ref, b1_ref, w2_ref, b2_ref,
                        *out_refs, n_rel, act, compute_score):
    """One CG-KGR entity-aggregation layer with all hops fused along the N axis.

    Fuses: collaborative-guidance signal, relation-grouped neighbor transform
    (MXU matmuls + mask select), guidance attention, Linear + activation, and
    (item layer only) the final user.item score + sigmoid.
    """
    f32 = jnp.float32
    tb, n, s, d = ngh_ref.shape

    # ---- collaborative-guidance signal (was a separate guide_kernel) ----
    tu = jnp.dot(nghu_ref[...].reshape(tb * s, d), wui_ref[...],
                 preferred_element_type=f32).reshape(tb, s, d)           # MXU
    collab = jnp.mean(tu, axis=1)                                        # [TB, D]
    base = base_ref[...]                                                 # [TB, D]
    g = jnp.tanh(_linear(base + collab, w2_ref[...], b2_ref[...]))       # [TB, D]
    g_b = g[:, None, None, :]                                            # hoisted broadcast

    # ---- relation transform: R grouped MXU matmuls + per-relation mask ----
    # trans[b,n,s,:] = ngh[b,n,s,:] @ W_R[rel[b,n,s]]  (contraction over the
    # FIRST index of W_r — same orientation as the original per-edge gather).
    ne = ngh_ref[...].reshape(tb * n * s, d)
    relv = rel_ref[...]                                                  # [TB, N, S] int32
    trans = jnp.zeros((tb, n, s, d), f32)
    for r in range(n_rel):                 # static unroll; n_rel is small
        tr = jnp.dot(ne, wr_ref[r],
                     preferred_element_type=f32).reshape(tb, n, s, d)    # MXU
        mask = (relv == r).astype(f32)[..., None]
        trans = trans + mask * tr

    # ---- guidance attention over the S sampled neighbors of each node ----
    logits = jnp.sum(g_b * trans, axis=-1)                               # [TB, N, S]
    att = _softmax_last(logits)
    agg = jnp.sum(att[..., None] * trans, axis=2)                        # [TB, N, D]

    # ---- Linear + activation ----
    h = (self_ref[...] + agg).reshape(tb * n, d)
    o = _linear(h, w1_ref[...], b1_ref[...])                             # MXU
    o = jnp.tanh(o) if act == "tanh" else jnp.maximum(o, 0.0)
    o = o.reshape(tb, n, d)
    out_refs[0][...] = o

    if compute_score:
        # item layer: N == 1 and base == new_user_embeddings
        new_i = o[:, 0, :]                                               # [TB, D]
        score = jnp.sum(base * new_i, axis=-1, keepdims=True)            # [TB, 1]
        out_refs[1][...] = score
        out_refs[2][...] = jax.nn.sigmoid(score)


# ---------------------------------------------------------------------------
# pallas_call wrappers (batch-tiled grid, parallel semantics)
# ---------------------------------------------------------------------------
def _run_user_agg(u_emb, ngh_emb, w_ui, ua_w, ua_b, *, tb):
    batch, dp = u_emb.shape
    return pl.pallas_call(
        user_agg_kernel,
        grid=(batch // tb,),
        in_specs=[_bspec_batched(u_emb.shape, tb),
                  _bspec_batched(ngh_emb.shape, tb),
                  _bspec_replicated(w_ui.shape),
                  _bspec_replicated(ua_w.shape),
                  _bspec_replicated(ua_b.shape)],
        out_specs=_bspec_batched((batch, dp), tb),
        out_shape=jax.ShapeDtypeStruct((batch, dp), jnp.float32),
        compiler_params=_compiler_params(),
    )(u_emb, ngh_emb, w_ui, ua_w, ua_b)


def _run_entity_layer(self_e, ngh_e, rel, ngh_user, base, w_ui, w_r, w1, b1, w2, b2,
                      *, act, compute_score, tb):
    batch, n_tot, dp = self_e.shape
    kern = functools.partial(entity_layer_kernel, n_rel=w_r.shape[0],
                             act=act, compute_score=compute_score)
    in_specs = [_bspec_batched(self_e.shape, tb),
                _bspec_batched(ngh_e.shape, tb),
                _bspec_batched(rel.shape, tb),
                _bspec_batched(ngh_user.shape, tb),
                _bspec_batched(base.shape, tb),
                _bspec_replicated(w_ui.shape),
                _bspec_replicated(w_r.shape),
                _bspec_replicated(w1.shape),
                _bspec_replicated(b1.shape),
                _bspec_replicated(w2.shape),
                _bspec_replicated(b2.shape)]
    out_shapes = [jax.ShapeDtypeStruct((batch, n_tot, dp), jnp.float32)]
    out_specs = [_bspec_batched((batch, n_tot, dp), tb)]
    if compute_score:
        out_shapes += [jax.ShapeDtypeStruct((batch, 1), jnp.float32)] * 2
        out_specs += [_bspec_batched((batch, 1), tb)] * 2
    single = len(out_shapes) == 1
    return pl.pallas_call(
        kern,
        grid=(batch // tb,),
        in_specs=in_specs,
        out_specs=out_specs[0] if single else tuple(out_specs),
        out_shape=out_shapes[0] if single else tuple(out_shapes),
        compiler_params=_compiler_params(),
    )(self_e, ngh_e, rel, ngh_user, base, w_ui, w_r, w1, b1, w2, b2)


# ---------------------------------------------------------------------------
# forward (gathers / reshapes are plain-JAX glue; hot math runs in the kernels)
# ---------------------------------------------------------------------------
def cgkgr_forward(params, adj, user_idx, item_idx, *, n_layer, sample_size, n_relation):
    d = params["user_emb"].shape[1]
    dp = ((d + 127) // 128) * 128       # lane-dense feature dim (zero padded)
    batch = int(user_idx.shape[0])
    s = sample_size
    tb = _pick_batch_tile(batch)

    # --- lane-dense zero padding of parameters (semantics preserving: padded
    #     weight rows/cols and biases are zero, so results are unchanged) ---
    user_emb = _pad_lane(params["user_emb"], dp, [1])
    entity_emb = _pad_lane(params["entity_emb"], dp, [1])
    w_r = _pad_lane(params["W_R"], dp, [1, 2])
    w_ui = w_r[n_relation]
    ua_w = _pad_lane(params["ua_W"], dp, [0, 1])
    ua_b = _pad_lane(params["ua_b"], dp, [1])
    ea_w1 = [_pad_lane(w, dp, [0, 1]) for w in params["ea_W1"]]
    ea_b1 = [_pad_lane(b, dp, [1]) for b in params["ea_b1"]]
    ea_w2 = [_pad_lane(w, dp, [0, 1]) for w in params["ea_W2"]]
    ea_b2 = [_pad_lane(b, dp, [1]) for b in params["ea_b2"]]

    # --- neighborhood gathers: plain-JAX glue feeding the kernels ---
    item_ngh = adj["u2i"][user_idx]                      # [B, S]
    u_emb = user_emb[user_idx]                           # [B, Dp]
    i_ngh_emb = entity_emb[item_ngh]                     # [B, S, Dp]

    # ---- aggregate_for_users: one batch-tiled kernel ----
    new_u = _run_user_agg(u_emb, i_ngh_emb, w_ui, ua_w, ua_b, tb=tb)

    # ---- aggregate_for_items ----
    ngh_user = adj["i2u"][item_idx]                      # [B, S]
    item_emb = entity_emb[item_idx]                      # [B, Dp]
    ngh_user_emb = user_emb[ngh_user]                    # [B, S, Dp]

    entities = [item_idx[:, None]]
    relations = []
    for i in range(n_layer):
        entities.append(adj["e2e"][entities[i]].reshape(batch, -1))
        relations.append(adj["rel"][entities[i]].reshape(batch, -1))
    entity_embs = [entity_emb[e] for e in entities]      # [B, S**i, Dp]

    scores = probs = None
    for i in range(n_layer):
        is_item_layer = (i == n_layer - 1)
        act = "tanh" if is_item_layer else "relu"
        base = new_u if is_item_layer else item_emb
        n_hops = n_layer - i
        hop_n = [s ** h for h in range(n_hops)]

        # fuse all hops of this layer along the N axis -> a single pallas_call
        self_cat = jnp.concatenate(
            [entity_embs[h].reshape(batch, hop_n[h], dp) for h in range(n_hops)], axis=1)
        ngh_cat = jnp.concatenate(
            [entity_embs[h + 1].reshape(batch, hop_n[h], s, dp) for h in range(n_hops)], axis=1)
        rel_cat = jnp.concatenate(
            [relations[h].reshape(batch, hop_n[h], s) for h in range(n_hops)],
            axis=1).astype(jnp.int32)

        res = _run_entity_layer(self_cat, ngh_cat, rel_cat, ngh_user_emb, base,
                                w_ui, w_r, ea_w1[i], ea_b1[i], ea_w2[i], ea_b2[i],
                                act=act, compute_score=is_item_layer, tb=tb)
        if is_item_layer:
            out, scores, probs = res
        else:
            out = res

        # split the fused N axis back into per-hop embeddings for the next layer
        next_embs, off = [], 0
        for h in range(n_hops):
            next_embs.append(out[:, off:off + hop_n[h], :])
            off += hop_n[h]
        entity_embs = next_embs

    return scores[:, 0], probs[:, 0]


# ---------------------------------------------------------------------------
# demo
# ---------------------------------------------------------------------------
if __name__ == "__main__":
    B, S, D = 16, 4, 32          # batch_size, sample_size, node_dim
    n_layer = 2
    n_relation = 5
    n_user, n_entity, n_items = 32, 48, 20

    key = jax.random.PRNGKey(0)
    keys = jax.random.split(key, 20)

    def xavier(k, shape):
        fan_in, fan_out = shape[-2], shape[-1]
        lim = (6.0 / (fan_in + fan_out)) ** 0.5
        return jax.random.uniform(k, shape, jnp.float32, -lim, lim)

    params = {
        "user_emb": xavier(keys[0], (n_user, D)),
        "entity_emb": xavier(keys[1], (n_entity, D)),
        "W_R": xavier(keys[2], (n_relation + 1, D, D)),
        "ua_W": xavier(keys[3], (D, D)),
        "ua_b": jnp.zeros((1, D), jnp.float32),
        "ea_W1": [xavier(keys[4 + i], (D, D)) for i in range(n_layer)],
        "ea_b1": [jnp.zeros((1, D), jnp.float32) for _ in range(n_layer)],
        "ea_W2": [xavier(keys[6 + i], (D, D)) for i in range(n_layer)],
        "ea_b2": [jnp.zeros((1, D), jnp.float32) for _ in range(n_layer)],
    }
    adj = {
        "u2i": jax.random.randint(keys[8], (n_user, S), 0, n_items, jnp.int32),
        "i2u": jax.random.randint(keys[9], (n_items, S), 0, n_user, jnp.int32),
        "e2e": jax.random.randint(keys[10], (n_entity, S), 0, n_entity, jnp.int32),
        "rel": jax.random.randint(keys[11], (n_entity, S), 0, n_relation, jnp.int32),
    }
    user_indices = jax.random.randint(keys[12], (B,), 0, n_user, jnp.int32)
    item_indices = jax.random.randint(keys[13], (B,), 0, n_items, jnp.int32)

    scores, scores_normalized = cgkgr_forward(
        params, adj, user_indices, item_indices,
        n_layer=n_layer, sample_size=S, n_relation=n_relation)
    jax.block_until_ready((scores, scores_normalized))
    assert scores.shape == (B,) and scores_normalized.shape == (B,)
    print("KERNEL_OK")
</pallas_src>

<mosaic_0001>
module attributes {stable_mosaic.version = 11 : i64} {
  func.func @user_agg_kernel(%arg0: i32, %arg1: memref<8x128xf32, #tpu.memory_space<vmem>>, %arg2: memref<8x4x128xf32, #tpu.memory_space<vmem>>, %arg3: memref<128x128xf32, #tpu.memory_space<vmem>>, %arg4: memref<128x128xf32, #tpu.memory_space<vmem>>, %arg5: memref<1x128xf32, #tpu.memory_space<vmem>>, %arg6: memref<8x128xf32, #tpu.memory_space<vmem>>) attributes {dimension_semantics = [#tpu.dimension_semantics<parallel>], iteration_bounds = array<i64: 2>, scalar_prefetch = 0 : i64, scratch_operands = 0 : i64, tpu.core_type = #tpu.core_type<tc>, window_params = [{transform_indices = @transform_0, window_bounds = array<i64: 8, 128>}, {transform_indices = @transform_1, window_bounds = array<i64: 8, 4, 128>}, {pipeline_mode = #tpu.pipeline_mode<synchronous>, transform_indices = @transform_2, window_bounds = array<i64: 128, 128>}, {pipeline_mode = #tpu.pipeline_mode<synchronous>, transform_indices = @transform_3, window_bounds = array<i64: 128, 128>}, {pipeline_mode = #tpu.pipeline_mode<synchronous>, transform_indices = @transform_4, window_bounds = array<i64: 1, 128>}, {transform_indices = @transform_5, window_bounds = array<i64: 8, 128>}]} {
    %c0 = arith.constant 0 : index
    %c0_0 = arith.constant 0 : index
    %0 = vector.load %arg1[%c0, %c0_0] : memref<8x128xf32, #tpu.memory_space<vmem>>, vector<8x128xf32>
    %c0_1 = arith.constant 0 : index
    %c0_2 = arith.constant 0 : index
    %c0_3 = arith.constant 0 : index
    %1 = vector.load %arg2[%c0_1, %c0_2, %c0_3] : memref<8x4x128xf32, #tpu.memory_space<vmem>>, vector<8x4x128xf32>
    %2 = vector.shape_cast %1 : vector<8x4x128xf32> to vector<32x128xf32>
    %c0_4 = arith.constant 0 : index
    %c0_5 = arith.constant 0 : index
    %3 = vector.load %arg3[%c0_4, %c0_5] : memref<128x128xf32, #tpu.memory_space<vmem>>, vector<128x128xf32>
    %cst = arith.constant dense<0.000000e+00> : vector<32x128xf32>
    %4 = tpu.matmul %2, %3, %cst {dimension_numbers = #tpu.dot_dimension_numbers<[1], [0], [0], [1], [0, 0, 1, 1], [], []>} : vector<32x128xf32>, vector<128x128xf32>, vector<32x128xf32> -> vector<32x128xf32>
    %5 = vector.shape_cast %4 : vector<32x128xf32> to vector<8x4x128xf32>
    %6 = vector.shape_cast %0 : vector<8x128xf32> to vector<8x1x128xf32>
    %7 = vector.broadcast %6 : vector<8x1x128xf32> to vector<8x4x128xf32>
    %8 = arith.mulf %7, %5 : vector<8x4x128xf32>
    %cst_6 = arith.constant dense<0.000000e+00> : vector<8x4xf32>
    %9 = vector.multi_reduction <add>, %8, %cst_6 [2] : vector<8x4x128xf32> to vector<8x4xf32>
    %cst_7 = arith.constant dense<0xFF800000> : vector<8xf32>
    %10 = vector.multi_reduction <maximumf>, %9, %cst_7 [1] : vector<8x4xf32> to vector<8xf32>
    %11 = vector.shape_cast %10 : vector<8xf32> to vector<8x1xf32>
    %12 = vector.broadcast %11 : vector<8x1xf32> to vector<8x4xf32>
    %13 = arith.subf %9, %12 : vector<8x4xf32>
    %14 = math.exp %13 : vector<8x4xf32>
    %cst_8 = arith.constant dense<0.000000e+00> : vector<8xf32>
    %15 = vector.multi_reduction <add>, %14, %cst_8 [1] : vector<8x4xf32> to vector<8xf32>
    %16 = vector.shape_cast %15 : vector<8xf32> to vector<8x1xf32>
    %17 = tpu.reciprocal %16 {approx = true} : vector<8x1xf32> -> vector<8x1xf32>
    %18 = vector.broadcast %17 : vector<8x1xf32> to vector<8x4xf32>
    %19 = arith.mulf %14, %18 : vector<8x4xf32>
    %20 = vector.shape_cast %19 : vector<8x4xf32> to vector<8x4x1xf32>
    %21 = vector.broadcast %20 : vector<8x4x1xf32> to vector<8x4x128xf32>
    %22 = arith.mulf %21, %5 : vector<8x4x128xf32>
    %cst_9 = arith.constant dense<0.000000e+00> : vector<8x128xf32>
    %23 = vector.multi_reduction <add>, %22, %cst_9 [1] : vector<8x4x128xf32> to vector<8x128xf32>
    %24 = arith.addf %0, %23 : vector<8x128xf32>
    %c0_10 = arith.constant 0 : index
    %c0_11 = arith.constant 0 : index
    %25 = vector.load %arg4[%c0_10, %c0_11] : memref<128x128xf32, #tpu.memory_space<vmem>>, vector<128x128xf32>
    %c0_12 = arith.constant 0 : index
    %c0_13 = arith.constant 0 : index
    %26 = vector.load %arg5[%c0_12, %c0_13] : memref<1x128xf32, #tpu.memory_space<vmem>>, vector<1x128xf32>
    %cst_14 = arith.constant dense<0.000000e+00> : vector<8x128xf32>
    %27 = tpu.matmul %24, %25, %cst_14 {dimension_numbers = #tpu.dot_dimension_numbers<[1], [1], [0], [0], [0, 0, 1, 0], [], []>} : vector<8x128xf32>, vector<128x128xf32>, vector<8x128xf32> -> vector<8x128xf32>
    %28 = vector.broadcast %26 : vector<1x128xf32> to vector<8x128xf32>
    %29 = arith.addf %27, %28 : vector<8x128xf32>
    %30 = math.tanh %29 : vector<8x128xf32>
    %c0_15 = arith.constant 0 : index
    %c0_16 = arith.constant 0 : index
    %31 = vector.load %arg6[%c0_15, %c0_16] : memref<8x128xf32, #tpu.memory_space<vmem>>, vector<8x128xf32>
    tpu.vector_store %arg6[%c0_15, %c0_16], %30 {strides = array<i32>} : memref<8x128xf32, #tpu.memory_space<vmem>>, vector<8x128xf32>,
    return
  }
  func.func @transform_0(%arg0: i32) -> (i32, i32) {
    %c0_i32 = arith.constant 0 : i32
    %c0_i32_0 = arith.constant 0 : i32
    return %arg0, %c0_i32 : i32, i32
  }
  func.func @transform_1(%arg0: i32) -> (i32, i32, i32) {
    %c0_i32 = arith.constant 0 : i32
    %c0_i32_0 = arith.constant 0 : i32
    %c0_i32_1 = arith.constant 0 : i32
    return %arg0, %c0_i32, %c0_i32_0 : i32, i32, i32
  }
  func.func @transform_2(%arg0: i32) -> (i32, i32) {
    %c0_i32 = arith.constant 0 : i32
    %c0_i32_0 = arith.constant 0 : i32
    %c0_i32_1 = arith.constant 0 : i32
    return %c0_i32, %c0_i32_0 : i32, i32
  }
  func.func @transform_3(%arg0: i32) -> (i32, i32) {
    %c0_i32 = arith.constant 0 : i32
    %c0_i32_0 = arith.constant 0 : i32
    %c0_i32_1 = arith.constant 0 : i32
    return %c0_i32, %c0_i32_0 : i32, i32
  }
  func.func @transform_4(%arg0: i32) -> (i32, i32) {
    %c0_i32 = arith.constant 0 : i32
    %c0_i32_0 = arith.constant 0 : i32
    %c0_i32_1 = arith.constant 0 : i32
    return %c0_i32, %c0_i32_0 : i32, i32
  }
  func.func @transform_5(%arg0: i32) -> (i32, i32) {
    %c0_i32 = arith.constant 0 : i32
    %c0_i32_0 = arith.constant 0 : i32
    return %arg0, %c0_i32 : i32, i32
  }
}

</mosaic_0001>

<llo_original>
// kernel: tpu_custom_call.1
$region0: #{tpu_custom_call.1}
  #allocation0 [shape = 'u32[]', space=smem, size = 0x4, offset = 0x4, fixed_abs, tag = 'smem constant byte address 0x4 - core index']
  #allocation1 [shape = 'u32[144,128]{1,0:T(1,128)}', space=vmem, size = 0x12000, scoped, tag = 'internal scratch']
  %s0 = inlined_call_operand.hbm [shape: f32[16,128], index: 0, kind: input, shape index: {}]
  %s1 = inlined_call_operand.hbm [shape: f32[16,4,128], index: 1, kind: input, shape index: {}]
  %s2 = inlined_call_operand.hbm [shape: f32[128,128], index: 2, kind: input, shape index: {}]
  %s3 = inlined_call_operand.hbm [shape: f32[128,128], index: 3, kind: input, shape index: {}]
  %s4 = inlined_call_operand.vmem [shape: f32[1,128], index: 4, kind: input, shape index: {}]
  %s5 = inlined_call_operand.hbm [shape: f32[16,128], index: 5, kind: output, shape index: {}]
  %s6 = sld [smem:[#allocation0]]
  $region69: #{tpu_custom_call.1} parent=0
    _
  %s8 = ssub.s32 1, %s6
  %s9 = scalar_select 0, %s8, %s6
  $region1: #{tpu_custom_call.1} parent=0
    #allocation2 [shape = 'u8[8192]{0}', space=vmem, size = 0x2000, scoped, tag = 'input window, operand 0']
    #allocation3 [shape = 's32[2]{0}', space=sflag, size = 0x8, scoped, tag = 'scoped memory for tpu_custom_call.1']
    #allocation4 [shape = 's32[2]{0}', space=sflag, size = 0x8, scoped, tag = 'scoped memory for tpu_custom_call.1']
    #allocation5 [shape = 'u8[32768]{0}', space=vmem, size = 0x8000, scoped, tag = 'input window, operand 1']
    #allocation6 [shape = 's32[2]{0}', space=sflag, size = 0x8, scoped, tag = 'scoped memory for tpu_custom_call.1']
    #allocation7 [shape = 'u8[65536]{0}', space=vmem, size = 0x10000, scoped, tag = 'input window, operand 2, single buffered']
    #allocation8 [shape = 'u8[65536]{0}', space=vmem, size = 0x10000, scoped, tag = 'input window, operand 3, single buffered']
    #allocation9 [shape = 's32[1]{0}', space=sflag, size = 0x4, scoped, tag = 'scoped memory for tpu_custom_call.1']
    #allocation10 [shape = 'u8[8192]{0}', space=vmem, size = 0x2000, scoped, tag = 'output window, operand 0']
    %10 = vsyncpa [#allocation3], 0
    %s11 = scalar_lea.sflag [#allocation3], 1
    %12 = vsyncpa %s11, 0
    %13 = vsyncpa [#allocation6], 0
    %s14 = scalar_lea.sflag [#allocation6], 1
    %15 = vsyncpa %s14, 0
    %16 = vsyncpa [#allocation9], 0
    %17 = vsyncpa [#allocation4], 0
    %s18 = scalar_lea.sflag [#allocation4], 1
    %19 = vsyncpa %s18, 0
    loop: start=0, step=1, limit=4
    $region2: #{tpu_custom_call.1} parent=1 // loop_pre_header
      _
    $region3: #{tpu_custom_call.1} parent=1 // loop_header
      %s21 = sphi 0, %s25
      %p22 = scmp.ge.s32.totalorder %s21, 4
      %s31 = sphi 0, %s33
      %s34 = sphi 0, %s31
      %s35 = sphi 0, %s34
      %s51 = sphi 0, %s35
      %s57 = sphi 0, %s59
      %s60 = sphi 0, %s57
      %s61 = sphi 0, %s60
      %s77 = sphi 0, %s61
      %s81 = sphi 0, %s81
      %s83 = sphi 0, %s81
      %s84 = sphi 0, %s83
      %s98 = sphi 0, %s84
      %s102 = sphi 0, %s102
      %s104 = sphi 0, %s102
      %s105 = sphi 0, %s104
      %s119 = sphi 0, %s105
      %s123 = sphi 0, %s123
      %s125 = sphi 0, %s123
      %s126 = sphi 0, %s125
      %s140 = sphi 0, %s126
      %s146 = sphi 0, %s148
      %s149 = sphi 0, %s146
      %s150 = sphi 0, %s149
      %s166 = sphi 0, %s150
    $region4: #{tpu_custom_call.1} parent=1 // loop_header_branch
      %24 = sbr.rel (%p22) target = $region8
    $region5: #{tpu_custom_call.1} parent=1 // loop_body
      %s26 = ssub.s32 %s21, 1
      %s27 = ssub.s32 %s21, 2
      %s28 = sadd.s32 %s21, 1
      %s29 = ssub.s32 %s21, %s28
      %p30 = scmp.eq.s32.totalorder %s29, 0
      %s32 = sadd.s32 %s31, 1
      %s33 = scalar_select %p30, %s31, %s32
      %p36 = pneg %p30
      %p37 = scmp.eq.s32.totalorder %s21, 1
      %p38 = por %p36, %p37
      %p39 = scmp.ne.s32.totalorder %s31, %s34
      %p40 = scmp.eq.s32.totalorder %s21, 0
      %p41 = por %p39, %p40
      %p42 = scmp.ne.s32.totalorder %s31, %s34
      %p43 = scmp.eq.s32.totalorder %s26, 1
      %p44 = por %p42, %p43
      %p45 = scmp.ne.s32.totalorder %s34, %s35
      %p46 = scmp.eq.s32.totalorder %s26, 0
      %p47 = por %p45, %p46
      %p48 = scmp.ne.s32.totalorder %s34, %s35
      %p49 = scmp.eq.s32.totalorder %s27, 1
      %p50 = por %p48, %p49
      %p52 = scmp.ne.s32.totalorder %s35, %s51
      %p53 = scmp.eq.s32.totalorder %s27, 0
      %p54 = por %p52, %p53
      %s55 = ssub.s32 %s21, %s28
      %p56 = scmp.eq.s32.totalorder %s55, 0
      %s58 = sadd.s32 %s57, 1
      %s59 = scalar_select %p56, %s57, %s58
      %p62 = pneg %p56
      %p63 = scmp.eq.s32.totalorder %s21, 1
      %p64 = por %p62, %p63
      %p65 = scmp.ne.s32.totalorder %s57, %s60
      %p66 = scmp.eq.s32.totalorder %s21, 0
      %p67 = por %p65, %p66
      %p68 = scmp.ne.s32.totalorder %s57, %s60
      %p69 = scmp.eq.s32.totalorder %s26, 1
      %p70 = por %p68, %p69
      %p71 = scmp.ne.s32.totalorder %s60, %s61
      %p72 = scmp.eq.s32.totalorder %s26, 0
      %p73 = por %p71, %p72
      %p74 = scmp.ne.s32.totalorder %s60, %s61
      %p75 = scmp.eq.s32.totalorder %s27, 1
      %p76 = por %p74, %p75
      %p78 = scmp.ne.s32.totalorder %s61, %s77
      %p79 = scmp.eq.s32.totalorder %s27, 0
      %p80 = por %p78, %p79
      %s82 = sadd.s32 %s81, 1
      %p85 = scmp.eq.s32.totalorder %s21, 1
      %p86 = scmp.ne.s32.totalorder %s81, %s83
      %p87 = scmp.eq.s32.totalorder %s21, 0
      %p88 = por %p86, %p87
      %p89 = scmp.ne.s32.totalorder %s81, %s83
      %p90 = scmp.eq.s32.totalorder %s26, 1
      %p91 = por %p89, %p90
      %p92 = scmp.ne.s32.totalorder %s83, %s84
      %p93 = scmp.eq.s32.totalorder %s26, 0
      %p94 = por %p92, %p93
      %p95 = scmp.ne.s32.totalorder %s83, %s84
      %p96 = scmp.eq.s32.totalorder %s27, 1
      %p97 = por %p95, %p96
      %p99 = scmp.ne.s32.totalorder %s84, %s98
      %p100 = scmp.eq.s32.totalorder %s27, 0
      %p101 = por %p99, %p100
      %s103 = sadd.s32 %s102, 1
      %p106 = scmp.eq.s32.totalorder %s21, 1
      %p107 = scmp.ne.s32.totalorder %s102, %s104
      %p108 = scmp.eq.s32.totalorder %s21, 0
      %p109 = por %p107, %p108
      %p110 = scmp.ne.s32.totalorder %s102, %s104
      %p111 = scmp.eq.s32.totalorder %s26, 1
      %p112 = por %p110, %p111
      %p113 = scmp.ne.s32.totalorder %s104, %s105
      %p114 = scmp.eq.s32.totalorder %s26, 0
      %p115 = por %p113, %p114
      %p116 = scmp.ne.s32.totalorder %s104, %s105
      %p117 = scmp.eq.s32.totalorder %s27, 1
      %p118 = por %p116, %p117
      %p120 = scmp.ne.s32.totalorder %s105, %s119
      %p121 = scmp.eq.s32.totalorder %s27, 0
      %p122 = por %p120, %p121
      %s124 = sadd.s32 %s123, 1
      %p127 = scmp.eq.s32.totalorder %s21, 1
      %p128 = scmp.ne.s32.totalorder %s123, %s125
      %p129 = scmp.eq.s32.totalorder %s21, 0
      %p130 = por %p128, %p129
      %p131 = scmp.ne.s32.totalorder %s123, %s125
      %p132 = scmp.eq.s32.totalorder %s26, 1
      %p133 = por %p131, %p132
      %p134 = scmp.ne.s32.totalorder %s125, %s126
      %p135 = scmp.eq.s32.totalorder %s26, 0
      %p136 = por %p134, %p135
      %p137 = scmp.ne.s32.totalorder %s125, %s126
      %p138 = scmp.eq.s32.totalorder %s27, 1
      %p139 = por %p137, %p138
      %p141 = scmp.ne.s32.totalorder %s126, %s140
      %p142 = scmp.eq.s32.totalorder %s27, 0
      %p143 = por %p141, %p142
      %s144 = ssub.s32 %s21, %s28
      %p145 = scmp.eq.s32.totalorder %s144, 0
      %s147 = sadd.s32 %s146, 1
      %s148 = scalar_select %p145, %s146, %s147
      %p151 = pneg %p145
      %p152 = scmp.eq.s32.totalorder %s21, 1
      %p153 = por %p151, %p152
      %p154 = scmp.ne.s32.totalorder %s146, %s149
      %p155 = scmp.eq.s32.totalorder %s21, 0
      %p156 = por %p154, %p155
      %p157 = scmp.ne.s32.totalorder %s146, %s149
      %p158 = scmp.eq.s32.totalorder %s26, 1
      %p159 = por %p157, %p158
      %p160 = scmp.ne.s32.totalorder %s149, %s150
      %p161 = scmp.eq.s32.totalorder %s26, 0
      %p162 = por %p160, %p161
      %p163 = scmp.ne.s32.totalorder %s149, %s150
      %p164 = scmp.eq.s32.totalorder %s27, 1
      %p165 = por %p163, %p164
      %p167 = scmp.ne.s32.totalorder %s150, %s166
      %p168 = scmp.eq.s32.totalorder %s27, 0
      %p169 = por %p167, %p168
      %p170 = scmp.le.s32.totalorder 1, %s21
      %p171 = scmp.lt.s32.totalorder %s21, 3
      %p172 = pnand %p170, %p171
      %p173 = pneg %p172
      // Predicated region
      $region9: #{tpu_custom_call.1} parent=5 // pred_check
        _
      $region10: #{tpu_custom_call.1} parent=5 // pred_check_branch
        %175 = sbr.rel (%p172) target = $region12
      $region11: #{tpu_custom_call.1} parent=5 // pred_region
        %s176 = ssub.s32 %s21, 1
        // Predicated region
        $region13: #{tpu_custom_call.1} parent=11 // pred_check
          %p177 = pneg %p94
        $region14: #{tpu_custom_call.1} parent=11 // pred_check_branch
          %179 = sbr.rel (%p177) target = $region16
        $region15: #{tpu_custom_call.1} parent=11 // pred_region
          %s181 = ssub.s32 2048, 2048
          %182 = vsyncadd [#allocation6], %s181
          %s183 = sshll.u32 [#allocation7], 4
          %s184 = int_to_ptr.vmem [resolvable:$true] %s183
          %189 = dma.hbm_to_vmem [thread:$0]  %s2, 2048, %s184, [#allocation6], 128, 128, 8
        $region16: #{tpu_custom_call.1} parent=11 // pred_fallthru
          _
        // Predicated region
        $region17: #{tpu_custom_call.1} parent=11 // pred_check
          %p190 = pneg %p115
        $region18: #{tpu_custom_call.1} parent=11 // pred_check_branch
          %192 = sbr.rel (%p190) target = $region20
        $region19: #{tpu_custom_call.1} parent=11 // pred_region
          %s194 = ssub.s32 2048, 2048
          %195 = vsyncadd [#allocation9], %s194
          %s196 = sshll.u32 [#allocation8], 4
          %s197 = int_to_ptr.vmem [resolvable:$true] %s196
          %202 = dma.hbm_to_vmem [thread:$0]  %s3, 2048, %s197, [#allocation9], 128, 128, 8
        $region20: #{tpu_custom_call.1} parent=11 // pred_fallthru
          _
        // Predicated region
        $region21: #{tpu_custom_call.1} parent=11 // pred_check
          %p203 = pneg %p136
        $region22: #{tpu_custom_call.1} parent=11 // pred_check_branch
          %205 = sbr.rel (%p203) target = $region24
        $region23: #{tpu_custom_call.1} parent=11 // pred_region
          _
        $region24: #{tpu_custom_call.1} parent=11 // pred_fallthru
          _
      $region12: #{tpu_custom_call.1} parent=5 // pred_fallthru
        _
      %p206 = scmp.lt.s32.totalorder %s21, 2
      // Predicated region
      $region25: #{tpu_custom_call.1} parent=5 // pred_check
        %p207 = pneg %p206
      $region26: #{tpu_custom_call.1} parent=5 // pred_check_branch
        %209 = sbr.rel (%p207) target = $region28
      $region27: #{tpu_custom_call.1} parent=5 // pred_region
        // Predicated region
        $region29: #{tpu_custom_call.1} parent=27 // pred_check
          %p210 = pneg %p41
        $region30: #{tpu_custom_call.1} parent=27 // pred_check_branch
          %212 = sbr.rel (%p210) target = $region32
        $region31: #{tpu_custom_call.1} parent=27 // pred_region
          %s213 = sand.u32 %s31, 1
          %s214 = scalar_lea.sflag [#allocation3], %s213
          %s215 = sand.u32 %s31, 1
          %s216 = smul.addr %s215, 8
          %s217 = scalar_lea.vmem [#allocation2], %s216
          %s219 = ssub.s32 128, 128
          %220 = vsyncadd %s214, %s219
          %s221 = smul.addr %s21, 128
          %s222 = scalar_lea.hbm %s0, %s221
          %s224 = sshll.u32 %s217, 4
          %s225 = int_to_ptr.vmem [resolvable:$true] %s224
          %227 = dma.hbm_to_vmem [thread:$0]  %s222, 128, %s225, %s214
        $region32: #{tpu_custom_call.1} parent=27 // pred_fallthru
          _
        // Predicated region
        $region33: #{tpu_custom_call.1} parent=27 // pred_check
          %p228 = pneg %p67
        $region34: #{tpu_custom_call.1} parent=27 // pred_check_branch
          %230 = sbr.rel (%p228) target = $region36
        $region35: #{tpu_custom_call.1} parent=27 // pred_region
          %s231 = sand.u32 %s21, 1
          %s232 = scalar_lea.sflag [#allocation6], %s231
          %s233 = sand.u32 %s57, 1
          %s234 = smul.addr %s233, 32
          %s235 = scalar_lea.vmem [#allocation5], %s234
          %s236 = smul.u32 8, %s21
          %s238 = ssub.s32 512, 512
          %239 = vsyncadd %s232, %s238
          %s240 = smul.addr %s236, 64
          %s241 = scalar_lea.hbm %s1, %s240
          %s242 = sshll.u32 %s235, 4
          %s243 = int_to_ptr.vmem [resolvable:$true] %s242
          %248 = dma.hbm_to_vmem [thread:$0]  %s241, 512, %s243, %s232, 64, 64, 4
        $region36: #{tpu_custom_call.1} parent=27 // pred_fallthru
          _
      $region28: #{tpu_custom_call.1} parent=5 // pred_fallthru
        _
      %p249 = scmp.le.s32.totalorder 1, %s21
      %p250 = scmp.lt.s32.totalorder %s21, 3
      %p251 = pnand %p249, %p250
      %p252 = pneg %p251
      // Predicated region
      $region37: #{tpu_custom_call.1} parent=5 // pred_check
        _
      $region38: #{tpu_custom_call.1} parent=5 // pred_check_branch
        %254 = sbr.rel (%p251) target = $region40
      $region39: #{tpu_custom_call.1} parent=5 // pred_region
        %s255 = ssub.s32 %s21, 1
        %s256 = sand.u32 %s34, 1
        %s257 = scalar_lea.sflag [#allocation3], %s256
        %s258 = sand.u32 %s34, 1
        %s259 = smul.addr %s258, 8
        %s260 = scalar_lea.vmem [#allocation2], %s259
        // Predicated region
        $region41: #{tpu_custom_call.1} parent=39 // pred_check
          %p261 = pneg %p47
        $region42: #{tpu_custom_call.1} parent=39 // pred_check_branch
          %263 = sbr.rel (%p261) target = $region44
        $region43: #{tpu_custom_call.1} parent=39 // pred_region
          %264 = dma.done %s257, 128
        $region44: #{tpu_custom_call.1} parent=39 // pred_fallthru
          _
        %s265 = sand.u32 %s26, 1
        %s266 = scalar_lea.sflag [#allocation6], %s265
        %s267 = sand.u32 %s60, 1
        %s268 = smul.addr %s267, 32
        %s269 = scalar_lea.vmem [#allocation5], %s268
        // Predicated region
        $region45: #{tpu_custom_call.1} parent=39 // pred_check
          %p270 = pneg %p73
        $region46: #{tpu_custom_call.1} parent=39 // pred_check_branch
          %272 = sbr.rel (%p270) target = $region48
        $region47: #{tpu_custom_call.1} parent=39 // pred_region
          %273 = dma.done %s266, 512
        $region48: #{tpu_custom_call.1} parent=39 // pred_fallthru
          _
        // Predicated region
        $region49: #{tpu_custom_call.1} parent=39 // pred_check
          %p274 = pneg %p94
        $region50: #{tpu_custom_call.1} parent=39 // pred_check_branch
          %276 = sbr.rel (%p274) target = $region52
        $region51: #{tpu_custom_call.1} parent=39 // pred_region
          %277 = dma.done [#allocation6], 2048
        $region52: #{tpu_custom_call.1} parent=39 // pred_fallthru
          _
        // Predicated region
        $region53: #{tpu_custom_call.1} parent=39 // pred_check
          %p278 = pneg %p115
        $region54: #{tpu_custom_call.1} parent=39 // pred_check_branch
          %280 = sbr.rel (%p278) target = $region56
        $region55: #{tpu_custom_call.1} parent=39 // pred_region
          %281 = dma.done [#allocation9], 2048
        $region56: #{tpu_custom_call.1} parent=39 // pred_fallthru
          _
        %s282 = sand.u32 %s34, 1
        %s283 = scalar_lea.sflag [#allocation3], %s282
        %s284 = sand.u32 %s34, 1
        %s285 = smul.addr %s284, 8
        %s286 = scalar_lea.vmem [#allocation2], %s285
        %p287 = pneg %p47
        %p288 = pneg %p44
        %s289 = sand.u32 %s26, 1
        %s290 = scalar_lea.sflag [#allocation6], %s289
        %s291 = sand.u32 %s60, 1
        %s292 = smul.addr %s291, 32
        %s293 = scalar_lea.vmem [#allocation5], %s292
        %p294 = pneg %p73
        %p295 = pneg %p70
        %p296 = pneg %p94
        %p297 = pneg %p91
        %p298 = pneg %p115
        %p299 = pneg %p112
        %p300 = pneg %p136
        %p301 = pneg %p133
        %p302 = pneg %p162
        %p303 = pneg %p159
        %s304 = sand.u32 %s149, 1
        %s305 = scalar_lea.sflag [#allocation4], %s304
        %s306 = sand.u32 %s149, 1
        %s307 = smul.addr %s306, 8
        %s308 = scalar_lea.vmem [#allocation10], %s307
        %s309 = smul.u32 8, %s26
        %v310 = vld [vmem:[%s260] sm:$0xff]
        %v311 = vld [vmem:[%s269] sm:$0xf]
        %v312 = vld [vmem:[%s269 + $0x4] sm:$0xf]
        %v313 = vld [vmem:[%s269 + $0x8] sm:$0xf]
        %v314 = vld [vmem:[%s269 + $0xc] sm:$0xf]
        %v315 = vld [vmem:[%s269 + $0x10] sm:$0xf]
        %v316 = vld [vmem:[%s269 + $0x14] sm:$0xf]
        %v317 = vld [vmem:[%s269 + $0x18] sm:$0xf]
        %v318 = vld [vmem:[%s269 + $0x1c] sm:$0xf]
        %v319 = vld [vmem:[#allocation7] sm:$0xff]
        %v320 = vld [vmem:[#allocation7 + $0x8] sm:$0xff]
        %v321 = vld [vmem:[#allocation7 + $0x10] sm:$0xff]
        %v322 = vld [vmem:[#allocation7 + $0x18] sm:$0xff]
        %v323 = vld [vmem:[#allocation7 + $0x20] sm:$0xff]
        %v324 = vld [vmem:[#allocation7 + $0x28] sm:$0xff]
        %v325 = vld [vmem:[#allocation7 + $0x30] sm:$0xff]
        %v326 = vld [vmem:[#allocation7 + $0x38] sm:$0xff]
        %v327 = vld [vmem:[#allocation7 + $0x40] sm:$0xff]
        %v328 = vld [vmem:[#allocation7 + $0x48] sm:$0xff]
        %v329 = vld [vmem:[#allocation7 + $0x50] sm:$0xff]
        %v330 = vld [vmem:[#allocation7 + $0x58] sm:$0xff]
        %v331 = vld [vmem:[#allocation7 + $0x60] sm:$0xff]
        %v332 = vld [vmem:[#allocation7 + $0x68] sm:$0xff]
        %v333 = vld [vmem:[#allocation7 + $0x70] sm:$0xff]
        %v334 = vld [vmem:[#allocation7 + $0x78] sm:$0xff]
        %v343 = vcombine.low %v311, %v312
        %v344 = vcombine.low %v313, %v314
        %v345 = vcombine.low %v315, %v316
        %v346 = vcombine.low %v317, %v318
        %351 = vmatprep.subr.mxu0 0.0
        %352 = vmatpush1.msra.mxu0 %v319
        %353 = vmatprep.subr.mxu0 0.0
        %354 = vmatpush1.msra.mxu0 %v320
        %355 = vmatprep.subr.mxu0 0.0
        %356 = vmatpush1.msra.mxu0 %v321
        %357 = vmatprep.subr.mxu0 0.0
        %358 = vmatpush1.msra.mxu0 %v322
        %359 = vmatprep.subr.mxu0 0.0
        %360 = vmatpush1.msra.mxu0 %v323
        %361 = vmatprep.subr.mxu0 0.0
        %362 = vmatpush1.msra.mxu0 %v324
        %363 = vmatprep.subr.mxu0 0.0
        %364 = vmatpush1.msra.mxu0 %v325
        %365 = vmatprep.subr.mxu0 0.0
        %366 = vmatpush1.msra.mxu0 %v326
        %367 = vmatprep.subr.mxu0 0.0
        %368 = vmatpush1.msra.mxu0 %v327
        %369 = vmatprep.subr.mxu0 0.0
        %370 = vmatpush1.msra.mxu0 %v328
        %371 = vmatprep.subr.mxu0 0.0
        %372 = vmatpush1.msra.mxu0 %v329
        %373 = vmatprep.subr.mxu0 0.0
        %374 = vmatpush1.msra.mxu0 %v330
        %375 = vmatprep.subr.mxu0 0.0
        %376 = vmatpush1.msra.mxu0 %v331
        %377 = vmatprep.subr.mxu0 0.0
        %378 = vmatpush1.msra.mxu0 %v332
        %379 = vmatprep.subr.mxu0 0.0
        %380 = vmatpush1.msra.mxu0 %v333
        %381 = vmatprep.subr.mxu0 0.0
        %382 = vmatpush1.msra.mxu0 %v334
        %383 = vmatprep.subr.mxu0 0.0
        %384 = vmatpush1.msra.mxu0 0.0
        %385 = vmatprep.subr.mxu0 0.0
        %386 = vmatpush1.msra.mxu0 0.0
        %387 = vmatprep.subr.mxu0 0.0
        %388 = vmatpush1.msra.mxu0 0.0
        %389 = vmatprep.subr.mxu0 0.0
        %390 = vmatpush1.msra.mxu0 0.0
        %391 = vmatprep.subr.mxu0 0.0
        %392 = vmatpush1.msra.mxu0 0.0
        %393 = vmatprep.subr.mxu0 0.0
        %394 = vmatpush1.msra.mxu0 0.0
        %395 = vmatprep.subr.mxu0 0.0
        %396 = vmatpush1.msra.mxu0 0.0
        %397 = vmatprep.subr.mxu0 0.0
        %398 = vmatpush1.msra.mxu0 0.0
        %399 = vmatprep.subr.mxu0 0.0
        %400 = vmatpush1.msra.mxu0 0.0
        %401 = vmatprep.subr.mxu0 0.0
        %402 = vmatpush1.msra.mxu0 0.0
        %403 = vmatprep.subr.mxu0 0.0
        %404 = vmatpush1.msra.mxu0 0.0
        %405 = vmatprep.subr.mxu0 0.0
        %406 = vmatpush1.msra.mxu0 0.0
        %407 = vmatprep.subr.mxu0 0.0
        %408 = vmatpush1.msra.mxu0 0.0
        %409 = vmatprep.subr.mxu0 0.0
        %410 = vmatpush1.msra.mxu0 0.0
        %411 = vmatprep.subr.mxu0 0.0
        %412 = vmatpush1.msra.mxu0 0.0
        %413 = vmatprep.subr.mxu0 0.0
        %414 = vmatpush1.msra.mxu0 0.0
        %415 = vmatprep.mubr.f32.mxu0 0.0
        %416 = vmatmul.mubr.f32.gmra.mrb[0].mxu0 %v343
        %v417 = vpop.f32.mrb[0].mxu0
        %v418 = vadd.f32 0.0, %v417
        %v419 = vpop.f32.mrb[0].mxu0
        %420 = vmatprep.mubr.f32.mxu0 0.0
        %421 = vmatmul.mubr.f32.gmra.mrb[0].mxu0 %v344
        %v422 = vpop.f32.mrb[0].mxu0
        %v423 = vadd.f32 0.0, %v422
        %v424 = vpop.f32.mrb[0].mxu0
        %425 = vmatprep.mubr.f32.mxu0 0.0
        %426 = vmatmul.mubr.f32.gmra.mrb[0].mxu0 %v345
        %v427 = vpop.f32.mrb[0].mxu0
        %v428 = vadd.f32 0.0, %v427
        %v429 = vpop.f32.mrb[0].mxu0
        %430 = vmatprep.mubr.f32.mxu0 0.0
        %431 = vmatmul.mubr.f32.gmra.mrb[0].mxu0 %v346
        %v432 = vpop.f32.mrb[0].mxu0
        %v433 = vadd.f32 0.0, %v432
        %v434 = vpop.f32.mrb[0].mxu0
        %435 = vdwg.mxu0
        %v440 = vcombine.high %v418, %v418
        %v441 = vcombine.high %v423, %v423
        %v442 = vcombine.high %v428, %v428
        %v443 = vcombine.high %v433, %v433
        %v449 = vcombine.high %v310, %v310
        %v451 = vunpack.c.l.s4 1966171168
        %v452 = vunpack.c.0.s8 %v451
        %v453 = vlaneseq
        %v454 = vshrl.u32 %v453, 7
        %v455 = vsub.s32 %v452, %v454
        %v456 = vrot.slane %v310, %v455
        %v458 = vunpack.c.l.s4 1966171168
        %v459 = vunpack.c.0.s8 %v458
        %v460 = vlaneseq
        %v461 = vshrl.u32 %v460, 7
        %v462 = vsub.s32 %v459, %v461
        %v463 = vrot.slane %v449, %v462
        %v464 = vcombine.high %v456, %v456
        %v465 = vcombine.high %v463, %v463
        %v467 = vunpack.c.l.s4 1966171168
        %v468 = vunpack.c.0.s8 %v467
        %v469 = vlaneseq
        %v470 = vshrl.u32 %v469, 7
        %v471 = vsub.s32 %v468, %v470
        %v472 = vrot.slane %v456, %v471
        %v474 = vunpack.c.l.s4 1966171168
        %v475 = vunpack.c.0.s8 %v474
        %v476 = vlaneseq
        %v477 = vshrl.u32 %v476, 7
        %v478 = vsub.s32 %v475, %v477
        %v479 = vrot.slane %v463, %v478
        %v481 = vunpack.c.l.s4 1966171168
        %v482 = vunpack.c.0.s8 %v481
        %v483 = vlaneseq
        %v484 = vshrl.u32 %v483, 7
        %v485 = vsub.s32 %v482, %v484
        %v486 = vrot.slane %v464, %v485
        %v488 = vunpack.c.l.s4 1966171168
        %v489 = vunpack.c.0.s8 %v488
        %v490 = vlaneseq
        %v491 = vshrl.u32 %v490, 7
        %v492 = vsub.s32 %v489, %v491
        %v493 = vrot.slane %v465, %v492
        %v494 = vcombine.high %v472, %v472
        %v495 = vcombine.high %v479, %v479
        %v496 = vcombine.high %v486, %v486
        %v497 = vcombine.high %v493, %v493
        %v498 = vlaneseq
        %v499 = vshrl.u32 %v498, 7
        %v500 = vsub.s32 0, %v499
        %v501 = vrot.slane %v472, %v500
        %v502 = vlaneseq
        %v503 = vshrl.u32 %v502, 7
        %v504 = vsub.s32 0, %v503
        %v505 = vrot.slane %v486, %v504
        %v506 = vlaneseq
        %v507 = vshrl.u32 %v506, 7
        %v508 = vsub.s32 0, %v507
        %v509 = vrot.slane %v494, %v508
        %v510 = vlaneseq
        %v511 = vshrl.u32 %v510, 7
        %v512 = vsub.s32 0, %v511
        %v513 = vrot.slane %v496, %v512
        %v514 = vlaneseq
        %v515 = vshrl.u32 %v514, 7
        %v516 = vsub.s32 0, %v515
        %v517 = vrot.slane %v479, %v516
        %v518 = vlaneseq
        %v519 = vshrl.u32 %v518, 7
        %v520 = vsub.s32 0, %v519
        %v521 = vrot.slane %v493, %v520
        %v522 = vlaneseq
        %v523 = vshrl.u32 %v522, 7
        %v524 = vsub.s32 0, %v523
        %v525 = vrot.slane %v495, %v524
        %v526 = vlaneseq
        %v527 = vshrl.u32 %v526, 7
        %v528 = vsub.s32 0, %v527
        %v529 = vrot.slane %v497, %v528
        %v538 = vmul.f32 %v501, %v418
        %v539 = vmul.f32 %v505, %v440
        %v540 = vmul.f32 %v509, %v423
        %v541 = vmul.f32 %v513, %v441
        %v542 = vmul.f32 %v517, %v428
        %v543 = vmul.f32 %v521, %v442
        %v544 = vmul.f32 %v525, %v433
        %v545 = vmul.f32 %v529, %v443
        %vm546 = vcmask 1043456
        %v547 = vsel %vm546, %v538, 0.0
        %548 = vadd.xlane.f32.xlu0 %v547
        %v549 = vpop.xlane.xlu0 %548
        %v550 = vsel %vm546, %v539, 0.0
        %551 = vadd.xlane.f32.xlu0 %v550
        %v552 = vpop.xlane.xlu0 %551
        %v553 = vsel %vm546, %v540, 0.0
        %554 = vadd.xlane.f32.xlu0 %v553
        %v555 = vpop.xlane.xlu0 %554
        %v556 = vsel %vm546, %v541, 0.0
        %557 = vadd.xlane.f32.xlu0 %v556
        %v558 = vpop.xlane.xlu0 %557
        %v559 = vsel %vm546, %v542, 0.0
        %560 = vadd.xlane.f32.xlu0 %v559
        %v561 = vpop.xlane.xlu0 %560
        %v562 = vsel %vm546, %v543, 0.0
        %563 = vadd.xlane.f32.xlu0 %v562
        %v564 = vpop.xlane.xlu0 %563
        %v565 = vsel %vm546, %v544, 0.0
        %566 = vadd.xlane.f32.xlu0 %v565
        %v567 = vpop.xlane.xlu0 %566
        %v568 = vsel %vm546, %v545, 0.0
        %569 = vadd.xlane.f32.xlu0 %v568
        %v570 = vpop.xlane.xlu0 %569
        %v579 = vlaneseq
        %v580 = vand.u32 %v579, 127
        %v581 = vlaneseq
        %v582 = vshrl.u32 %v581, 7
        %v583 = vsub.s32 %v580, %v582
        %v584 = vrot.slane %v549, %v583
        %v585 = vlaneseq
        %v586 = vshrl.u32 %v585, 7
        %v587 = vsub.s32 %v580, %v586
        %v588 = vrot.slane %v552, %v587
        %v589 = vlaneseq
        %v590 = vshrl.u32 %v589, 7
        %v591 = vsub.s32 %v580, %v590
        %v592 = vrot.slane %v555, %v591
        %v593 = vlaneseq
        %v594 = vshrl.u32 %v593, 7
        %v595 = vsub.s32 %v580, %v594
        %v596 = vrot.slane %v558, %v595
        %v597 = vlaneseq
        %v598 = vshrl.u32 %v597, 7
        %v599 = vsub.s32 %v580, %v598
        %v600 = vrot.slane %v561, %v599
        %v601 = vlaneseq
        %v602 = vshrl.u32 %v601, 7
        %v603 = vsub.s32 %v580, %v602
        %v604 = vrot.slane %v564, %v603
        %v605 = vlaneseq
        %v606 = vshrl.u32 %v605, 7
        %v607 = vsub.s32 %v580, %v606
        %v608 = vrot.slane %v567, %v607
        %v609 = vlaneseq
        %v610 = vshrl.u32 %v609, 7
        %v611 = vsub.s32 %v580, %v610
        %v612 = vrot.slane %v570, %v611
        %vm613 = vcmask 1041409
        %v614 = vsel %vm613, %v588, %v584
        %vm615 = vcmask 1042434
        %v616 = vsel %vm615, %v592, %v614
        %vm617 = vcmask 1043459
        %v618 = vsel %vm617, %v596, %v616
        %vm619 = vcmask 1044484
        %v620 = vsel %vm619, %v600, %v618
        %vm621 = vcmask 1045509
        %v622 = vsel %vm621, %v604, %v620
        %vm623 = vcmask 1046534
        %v624 = vsel %vm623, %v608, %v622
        %vm625 = vcmask 1047559
        %v626 = vsel %vm625, %v612, %v624
        %vm628 = vcmask 31744
        %v629 = vsel %vm628, %v626, -inf
        %630 = vmax.xlane.f32.xlu0 %v629
        %v631 = vpop.xlane.xlu0 %630
        %v633 = vlaneseq
        %v634 = vshrl.u32 %v633, 7
        %v635 = vsub.s32 0, %v634
        %v636 = vrot.slane %v631, %v635
        %v637 = vlaneseq
        %v638 = vshrl.u32 %v637, 7
        %v639 = vsub.s32 1, %v638
        %v640 = vrot.slane %v631, %v639
        %v641 = vlaneseq
        %v642 = vshrl.u32 %v641, 7
        %v643 = vsub.s32 2, %v642
        %v644 = vrot.slane %v631, %v643
        %v645 = vlaneseq
        %v646 = vshrl.u32 %v645, 7
        %v647 = vsub.s32 3, %v646
        %v648 = vrot.slane %v631, %v647
        %v649 = vlaneseq
        %v650 = vshrl.u32 %v649, 7
        %v651 = vsub.s32 4, %v650
        %v652 = vrot.slane %v631, %v651
        %v653 = vlaneseq
        %v654 = vshrl.u32 %v653, 7
        %v655 = vsub.s32 5, %v654
        %v656 = vrot.slane %v631, %v655
        %v657 = vlaneseq
        %v658 = vshrl.u32 %v657, 7
        %v659 = vsub.s32 6, %v658
        %v660 = vrot.slane %v631, %v659
        %v661 = vlaneseq
        %v662 = vshrl.u32 %v661, 7
        %v663 = vsub.s32 7, %v662
        %v664 = vrot.slane %v631, %v663
        %v673 = vsub.f32 %v549, %v636
        %v674 = vsub.f32 %v552, %v640
        %v675 = vsub.f32 %v555, %v644
        %v676 = vsub.f32 %v558, %v648
        %v677 = vsub.f32 %v561, %v652
        %v678 = vsub.f32 %v564, %v656
        %v679 = vsub.f32 %v567, %v660
        %v680 = vsub.f32 %v570, %v664
        %v681 = vmul.f32 %v673, 1.442695
        %v682 = vpow.pop %v681
        %v683 = vmul.f32 %v674, 1.442695
        %v684 = vpow.pop %v683
        %v685 = vmul.f32 %v675, 1.442695
        %v686 = vpow.pop %v685
        %v687 = vmul.f32 %v676, 1.442695
        %v688 = vpow.pop %v687
        %v689 = vmul.f32 %v677, 1.442695
        %v690 = vpow.pop %v689
        %v691 = vmul.f32 %v678, 1.442695
        %v692 = vpow.pop %v691
        %v693 = vmul.f32 %v679, 1.442695
        %v694 = vpow.pop %v693
        %v695 = vmul.f32 %v680, 1.442695
        %v696 = vpow.pop %v695
        %705 = vset.pattern.permute.xlu0 0
        %706 = vperm.xlu0 %705, %v682
        %v707 = vpop.permute.xlu0 %706
        %708 = vset.pattern.permute.xlu0 0
        %709 = vperm.xlu0 %708, %v684
        %v710 = vpop.permute.xlu0 %709
        %711 = vset.pattern.permute.xlu0 0
        %712 = vperm.xlu0 %711, %v686
        %v713 = vpop.permute.xlu0 %712
        %714 = vset.pattern.permute.xlu0 0
        %715 = vperm.xlu0 %714, %v688
        %v716 = vpop.permute.xlu0 %715
        %717 = vset.pattern.permute.xlu0 0
        %718 = vperm.xlu0 %717, %v690
        %v719 = vpop.permute.xlu0 %718
        %720 = vset.pattern.permute.xlu0 0
        %721 = vperm.xlu0 %720, %v692
        %v722 = vpop.permute.xlu0 %721
        %723 = vset.pattern.permute.xlu0 0
        %724 = vperm.xlu0 %723, %v694
        %v725 = vpop.permute.xlu0 %724
        %726 = vset.pattern.permute.xlu0 0
        %727 = vperm.xlu0 %726, %v696
        %v728 = vpop.permute.xlu0 %727
        %v729 = vlaneseq
        %v730 = vshrl.u32 %v729, 7
        %v731 = vsub.s32 %v580, %v730
        %v732 = vrot.slane %v707, %v731
        %v733 = vlaneseq
        %v734 = vshrl.u32 %v733, 7
        %v735 = vsub.s32 %v580, %v734
        %v736 = vrot.slane %v710, %v735
        %v737 = vlaneseq
        %v738 = vshrl.u32 %v737, 7
        %v739 = vsub.s32 %v580, %v738
        %v740 = vrot.slane %v713, %v739
        %v741 = vlaneseq
        %v742 = vshrl.u32 %v741, 7
        %v743 = vsub.s32 %v580, %v742
        %v744 = vrot.slane %v716, %v743
        %v745 = vlaneseq
        %v746 = vshrl.u32 %v745, 7
        %v747 = vsub.s32 %v580, %v746
        %v748 = vrot.slane %v719, %v747
        %v749 = vlaneseq
        %v750 = vshrl.u32 %v749, 7
        %v751 = vsub.s32 %v580, %v750
        %v752 = vrot.slane %v722, %v751
        %v753 = vlaneseq
        %v754 = vshrl.u32 %v753, 7
        %v755 = vsub.s32 %v580, %v754
        %v756 = vrot.slane %v725, %v755
        %v757 = vlaneseq
        %v758 = vshrl.u32 %v757, 7
        %v759 = vsub.s32 %v580, %v758
        %v760 = vrot.slane %v728, %v759
        %v761 = vsel %vm613, %v736, %v732
        %v762 = vsel %vm615, %v740, %v761
        %v763 = vsel %vm617, %v744, %v762
        %v764 = vsel %vm619, %v748, %v763
        %v765 = vsel %vm621, %v752, %v764
        %v766 = vsel %vm623, %v756, %v765
        %v767 = vsel %vm625, %v760, %v766
        %v769 = vsel %vm628, %v767, 0.0
        %770 = vadd.xlane.f32.xlu0 %v769
        %v771 = vpop.xlane.xlu0 %770
        %v772 = vrcp.pop %v771
        %v774 = vlaneseq
        %v775 = vshrl.u32 %v774, 7
        %v776 = vsub.s32 0, %v775
        %v777 = vrot.slane %v772, %v776
        %v778 = vlaneseq
        %v779 = vshrl.u32 %v778, 7
        %v780 = vsub.s32 1, %v779
        %v781 = vrot.slane %v772, %v780
        %v782 = vlaneseq
        %v783 = vshrl.u32 %v782, 7
        %v784 = vsub.s32 2, %v783
        %v785 = vrot.slane %v772, %v784
        %v786 = vlaneseq
        %v787 = vshrl.u32 %v786, 7
        %v788 = vsub.s32 3, %v787
        %v789 = vrot.slane %v772, %v788
        %v790 = vlaneseq
        %v791 = vshrl.u32 %v790, 7
        %v792 = vsub.s32 4, %v791
        %v793 = vrot.slane %v772, %v792
        %v794 = vlaneseq
        %v795 = vshrl.u32 %v794, 7
        %v796 = vsub.s32 5, %v795
        %v797 = vrot.slane %v772, %v796
        %v798 = vlaneseq
        %v799 = vshrl.u32 %v798, 7
        %v800 = vsub.s32 6, %v799
        %v801 = vrot.slane %v772, %v800
        %v802 = vlaneseq
        %v803 = vshrl.u32 %v802, 7
        %v804 = vsub.s32 7, %v803
        %v805 = vrot.slane %v772, %v804
        %v814 = vmul.f32 %v682, %v777
        %v815 = vmul.f32 %v684, %v781
        %v816 = vmul.f32 %v686, %v785
        %v817 = vmul.f32 %v688, %v789
        %v818 = vmul.f32 %v690, %v793
        %v819 = vmul.f32 %v692, %v797
        %v820 = vmul.f32 %v694, %v801
        %v821 = vmul.f32 %v696, %v805
        %823 = vset.pattern.permute.xlu0 0
        %824 = vperm.xlu0 %823, %v814
        %v825 = vpop.permute.xlu0 %824
        %828 = vset.pattern.permute.xlu0 0
        %829 = vperm.xlu0 %828, %v815
        %v830 = vpop.permute.xlu0 %829
        %833 = vset.pattern.permute.xlu0 0
        %834 = vperm.xlu0 %833, %v816
        %v835 = vpop.permute.xlu0 %834
        %838 = vset.pattern.permute.xlu0 0
        %839 = vperm.xlu0 %838, %v817
        %v840 = vpop.permute.xlu0 %839
        %843 = vset.pattern.permute.xlu0 0
        %844 = vperm.xlu0 %843, %v818
        %v845 = vpop.permute.xlu0 %844
        %848 = vset.pattern.permute.xlu0 0
        %849 = vperm.xlu0 %848, %v819
        %v850 = vpop.permute.xlu0 %849
        %853 = vset.pattern.permute.xlu0 0
        %854 = vperm.xlu0 %853, %v820
        %v855 = vpop.permute.xlu0 %854
        %858 = vset.pattern.permute.xlu0 0
        %859 = vperm.xlu0 %858, %v821
        %v860 = vpop.permute.xlu0 %859
        %v862 = vmul.f32 %v825, %v418
        %v863 = vmul.f32 %v830, %v440
        %v864 = vmul.f32 %v835, %v423
        %v865 = vmul.f32 %v840, %v441
        %v866 = vmul.f32 %v845, %v428
        %v867 = vmul.f32 %v850, %v442
        %v868 = vmul.f32 %v855, %v433
        %v869 = vmul.f32 %v860, %v443
        %v870 = vsel %vm546, %v862, 0.0
        %v871 = vrot.slane %v870, 4
        %v872 = vadd.f32 %v870, %v871
        %v873 = vrot.slane %v872, 2
        %v874 = vadd.f32 %v872, %v873
        %v875 = vrot.slane %v874, 1
        %v876 = vadd.f32 %v874, %v875
        %v877 = vsel %vm546, %v863, 0.0
        %v878 = vrot.slane %v877, 4
        %v879 = vadd.f32 %v877, %v878
        %v880 = vrot.slane %v879, 2
        %v881 = vadd.f32 %v879, %v880
        %v882 = vrot.slane %v881, 1
        %v883 = vadd.f32 %v881, %v882
        %v884 = vsel %vm546, %v864, 0.0
        %v885 = vrot.slane %v884, 4
        %v886 = vadd.f32 %v884, %v885
        %v887 = vrot.slane %v886, 2
        %v888 = vadd.f32 %v886, %v887
        %v889 = vrot.slane %v888, 1
        %v890 = vadd.f32 %v888, %v889
        %v891 = vsel %vm546, %v865, 0.0
        %v892 = vrot.slane %v891, 4
        %v893 = vadd.f32 %v891, %v892
        %v894 = vrot.slane %v893, 2
        %v895 = vadd.f32 %v893, %v894
        %v896 = vrot.slane %v895, 1
        %v897 = vadd.f32 %v895, %v896
        %v898 = vsel %vm546, %v866, 0.0
        %v899 = vrot.slane %v898, 4
        %v900 = vadd.f32 %v898, %v899
        %v901 = vrot.slane %v900, 2
        %v902 = vadd.f32 %v900, %v901
        %v903 = vrot.slane %v902, 1
        %v904 = vadd.f32 %v902, %v903
        %v905 = vsel %vm546, %v867, 0.0
        %v906 = vrot.slane %v905, 4
        %v907 = vadd.f32 %v905, %v906
        %v908 = vrot.slane %v907, 2
        %v909 = vadd.f32 %v907, %v908
        %v910 = vrot.slane %v909, 1
        %v911 = vadd.f32 %v909, %v910
        %v912 = vsel %vm546, %v868, 0.0
        %v913 = vrot.slane %v912, 4
        %v914 = vadd.f32 %v912, %v913
        %v915 = vrot.slane %v914, 2
        %v916 = vadd.f32 %v914, %v915
        %v917 = vrot.slane %v916, 1
        %v918 = vadd.f32 %v916, %v917
        %v919 = vsel %vm546, %v869, 0.0
        %v920 = vrot.slane %v919, 4
        %v921 = vadd.f32 %v919, %v920
        %v922 = vrot.slane %v921, 2
        %v923 = vadd.f32 %v921, %v922
        %v924 = vrot.slane %v923, 1
        %v925 = vadd.f32 %v923, %v924
        %v934 = vsel %vm613, %v883, %v876
        %v935 = vsel %vm615, %v890, %v934
        %v936 = vsel %vm617, %v897, %v935
        %v937 = vsel %vm619, %v904, %v936
        %v938 = vsel %vm621, %v911, %v937
        %v939 = vsel %vm623, %v918, %v938
        %v940 = vsel %vm625, %v925, %v939
        %v942 = vadd.f32 %v310, %v940
        %v943 = vld [vmem:[#allocation8] sm:$0xff]
        %v944 = vld [vmem:[#allocation8 + $0x8] sm:$0xff]
        %v945 = vld [vmem:[#allocation8 + $0x10] sm:$0xff]
        %v946 = vld [vmem:[#allocation8 + $0x18] sm:$0xff]
        %v947 = vld [vmem:[#allocation8 + $0x20] sm:$0xff]
        %v948 = vld [vmem:[#allocation8 + $0x28] sm:$0xff]
        %v949 = vld [vmem:[#allocation8 + $0x30] sm:$0xff]
        %v950 = vld [vmem:[#allocation8 + $0x38] sm:$0xff]
        %v951 = vld [vmem:[#allocation8 + $0x40] sm:$0xff]
        %v952 = vld [vmem:[#allocation8 + $0x48] sm:$0xff]
        %v953 = vld [vmem:[#allocation8 + $0x50] sm:$0xff]
        %v954 = vld [vmem:[#allocation8 + $0x58] sm:$0xff]
        %v955 = vld [vmem:[#allocation8 + $0x60] sm:$0xff]
        %v956 = vld [vmem:[#allocation8 + $0x68] sm:$0xff]
        %v957 = vld [vmem:[#allocation8 + $0x70] sm:$0xff]
        %v958 = vld [vmem:[#allocation8 + $0x78] sm:$0xff]
        %v959 = vld [vmem:[%s4] sm:$0x1]
        %v961 = vlaneseq
        %v962 = vshrl.u32 %v961, 7
        %v963 = vsub.s32 0, %v962
        %v964 = vrot.slane %v959, %v963
        %966 = vmatprep.subr.mxu0 0.0
        %967 = vmatpush1.xpose.msra.mxu0 %v943
        %968 = vmatprep.subr.mxu0 0.0
        %969 = vmatpush1.xpose.msra.mxu0 %v944
        %970 = vmatprep.subr.mxu0 0.0
        %971 = vmatpush1.xpose.msra.mxu0 %v945
        %972 = vmatprep.subr.mxu0 0.0
        %973 = vmatpush1.xpose.msra.mxu0 %v946
        %974 = vmatprep.subr.mxu0 0.0
        %975 = vmatpush1.xpose.msra.mxu0 %v947
        %976 = vmatprep.subr.mxu0 0.0
        %977 = vmatpush1.xpose.msra.mxu0 %v948
        %978 = vmatprep.subr.mxu0 0.0
        %979 = vmatpush1.xpose.msra.mxu0 %v949
        %980 = vmatprep.subr.mxu0 0.0
        %981 = vmatpush1.xpose.msra.mxu0 %v950
        %982 = vmatprep.subr.mxu0 0.0
        %983 = vmatpush1.xpose.msra.mxu0 %v951
        %984 = vmatprep.subr.mxu0 0.0
        %985 = vmatpush1.xpose.msra.mxu0 %v952
        %986 = vmatprep.subr.mxu0 0.0
        %987 = vmatpush1.xpose.msra.mxu0 %v953
        %988 = vmatprep.subr.mxu0 0.0
        %989 = vmatpush1.xpose.msra.mxu0 %v954
        %990 = vmatprep.subr.mxu0 0.0
        %991 = vmatpush1.xpose.msra.mxu0 %v955
        %992 = vmatprep.subr.mxu0 0.0
        %993 = vmatpush1.xpose.msra.mxu0 %v956
        %994 = vmatprep.subr.mxu0 0.0
        %995 = vmatpush1.xpose.msra.mxu0 %v957
        %996 = vmatprep.subr.mxu0 0.0
        %997 = vmatpush1.xpose.msra.mxu0 %v958
        %998 = vmatprep.subr.mxu0 0.0
        %999 = vmatpush1.xpose.msra.mxu0 0.0
        %1000 = vmatprep.subr.mxu0 0.0
        %1001 = vmatpush1.xpose.msra.mxu0 0.0
        %1002 = vmatprep.subr.mxu0 0.0
        %1003 = vmatpush1.xpose.msra.mxu0 0.0
        %1004 = vmatprep.subr.mxu0 0.0
        %1005 = vmatpush1.xpose.msra.mxu0 0.0
        %1006 = vmatprep.subr.mxu0 0.0
        %1007 = vmatpush1.xpose.msra.mxu0 0.0
        %1008 = vmatprep.subr.mxu0 0.0
        %1009 = vmatpush1.xpose.msra.mxu0 0.0
        %1010 = vmatprep.subr.mxu0 0.0
        %1011 = vmatpush1.xpose.msra.mxu0 0.0
        %1012 = vmatprep.subr.mxu0 0.0
        %1013 = vmatpush1.xpose.msra.mxu0 0.0
        %1014 = vmatprep.subr.mxu0 0.0
        %1015 = vmatpush1.xpose.msra.mxu0 0.0
        %1016 = vmatprep.subr.mxu0 0.0
        %1017 = vmatpush1.xpose.msra.mxu0 0.0
        %1018 = vmatprep.subr.mxu0 0.0
        %1019 = vmatpush1.xpose.msra.mxu0 0.0
        %1020 = vmatprep.subr.mxu0 0.0
        %1021 = vmatpush1.xpose.msra.mxu0 0.0
        %1022 = vmatprep.subr.mxu0 0.0
        %1023 = vmatpush1.xpose.msra.mxu0 0.0
        %1024 = vmatprep.subr.mxu0 0.0
        %1025 = vmatpush1.xpose.msra.mxu0 0.0
        %1026 = vmatprep.subr.mxu0 0.0
        %1027 = vmatpush1.xpose.msra.mxu0 0.0
        %1028 = vmatprep.subr.mxu0 0.0
        %1029 = vmatpush1.xpose.msra.mxu0 0.0
        %1030 = vmatprep.mubr.f32.mxu0 0.0
        %1031 = vmatmul.mubr.f32.gmra.mrb[0].mxu0 %v942
        %v1032 = vpop.f32.mrb[0].mxu0
        %v1033 = vadd.f32 %v964, %v1032
        %v1034 = vpop.f32.mrb[0].mxu0
        %1035 = vdwg.mxu0
        %v1036 = vtanh.pop %v1033
        %1037 = vst [vmem:[%s308] sm:$0xff] %v1036
        %s1038 = sand.u32 %s149, 1
        %s1039 = scalar_lea.sflag [#allocation4], %s1038
        %s1040 = sand.u32 %s149, 1
        %s1041 = smul.addr %s1040, 8
        %s1042 = scalar_lea.vmem [#allocation10], %s1041
        // Predicated region
        $region57: #{tpu_custom_call.1} parent=39 // pred_check
          %p1043 = pneg %p159
        $region58: #{tpu_custom_call.1} parent=39 // pred_check_branch
          %1045 = sbr.rel (%p1043) target = $region60
        $region59: #{tpu_custom_call.1} parent=39 // pred_region
          %s1047 = ssub.s32 128, 128
          %1048 = vsyncadd %s1039, %s1047
          %s1049 = smul.addr %s26, 128
          %s1050 = scalar_lea.hbm %s5, %s1049
          %s1052 = sshll.u32 %s1042, 4
          %s1053 = int_to_ptr.vmem [resolvable:$true] %s1052
          %1055 = dma.vmem_to_hbm [thread:$0]  %s1053, 128, %s1050, %s1039
        $region60: #{tpu_custom_call.1} parent=39 // pred_fallthru
          _
      $region40: #{tpu_custom_call.1} parent=5 // pred_fallthru
        _
      %p1056 = scmp.le.s32.totalorder 2, %s21
      // Predicated region
      $region61: #{tpu_custom_call.1} parent=5 // pred_check
        %p1057 = pneg %p1056
      $region62: #{tpu_custom_call.1} parent=5 // pred_check_branch
        %1059 = sbr.rel (%p1057) target = $region64
      $region63: #{tpu_custom_call.1} parent=5 // pred_region
        %s1060 = ssub.s32 %s21, 2
        // Predicated region
        $region65: #{tpu_custom_call.1} parent=63 // pred_check
          %p1061 = pneg %p165
        $region66: #{tpu_custom_call.1} parent=63 // pred_check_branch
          %1063 = sbr.rel (%p1061) target = $region68
        $region67: #{tpu_custom_call.1} parent=63 // pred_region
          %s1064 = sand.u32 %s150, 1
          %s1065 = scalar_lea.sflag [#allocation4], %s1064
          %s1066 = sand.u32 %s150, 1
          %s1067 = smul.addr %s1066, 8
          %s1068 = scalar_lea.vmem [#allocation10], %s1067
          %1069 = dma.done %s1065, 128
        $region68: #{tpu_custom_call.1} parent=63 // pred_fallthru
          _
      $region64: #{tpu_custom_call.1} parent=5 // pred_fallthru
        _
    $region6: #{tpu_custom_call.1} parent=1 // loop_footer
      %s25 = sadd.s32 1, %s21
    $region7: #{tpu_custom_call.1} parent=1 // loop_footer_branch
      %20 = sbr.rel target = $region3
    $region8: #{tpu_custom_call.1} parent=1 // loop_exit
      _
    %1070 = vsyncpa [#allocation3], 1
    %s1071 = scalar_lea.sflag [#allocation3], 1
    %1072 = vsyncpa %s1071, 1
    %1073 = vsyncpa [#allocation6], 1
    %s1074 = scalar_lea.sflag [#allocation6], 1
    %1075 = vsyncpa %s1074, 1
    %1076 = vsyncpa [#allocation9], 1
    %1077 = vsyncpa [#allocation4], 1
    %s1078 = scalar_lea.sflag [#allocation4], 1
    %1079 = vsyncpa %s1078, 1

</llo_original>
